<compile_context>
chip_gen: v5e
topology: v5e:2x2
jax: 0.10.0
libtpu: 0.0.40
codegen_flags: <defaults>
</compile_context>

<pallas_src>
import functools

import jax
import jax.numpy as jnp
from jax import lax
from jax.experimental import pallas as pl
from jax.experimental.pallas import tpu as pltpu


def _round_up(x, m):
    return ((x + m - 1) // m) * m


def _device_kind_lower():
    try:
        return jax.devices()[0].device_kind.lower()
    except Exception:
        return ""


def _default_num_splits():
    # 2-way "parallel" leading axis only helps where there are 2 TensorCores
    # (megacore v4/v5p, v7x).  On 1-TC v5e/v6e it is just a serial loop that can
    # create a duplicate clamped block and force the mask path, so use 1 there.
    kind = _device_kind_lower()
    for tag in ("v7", "v4", "v5p"):
        if tag in kind:
            return 2
    return 1


def _default_target_block_bytes():
    # v7x HBM (~3.2 TB/s) makes small tiles overhead-dominated; go bigger there
    # (2 inputs x 2 buffers x 8 MiB = 32 MiB, comfortably under 64 MiB VMEM).
    kind = _device_kind_lower()
    return (8 << 20) if "v7" in kind else (4 << 20)


def _log_l1_kernel(x_ref, y_ref, o_ref, *, tile_rows, steps, n_rows, need_mask):
    c = pl.program_id(0)   # megacore split (parallel)
    i = pl.program_id(1)   # reduction step over row tiles (arbitrary)

    # Zero this split's accumulator block on its first reduction step.
    @pl.when(i == 0)
    def _():
        o_ref[...] = jnp.zeros_like(o_ref)

    x = x_ref[...].astype(jnp.float32)
    y = y_ref[...].astype(jnp.float32)
    # No eps clamp — matches torch.log exactly (reference module does not clamp).
    diff = jnp.abs(jnp.log(y) - jnp.log(x))

    def tile_sum(d):
        f = d.shape[-1]
        if tile_rows % 64 == 0:
            # Two-stage reduce: shortens the dependent f32 add chain for big tiles
            # (important on v7x where per-step DMA time shrinks) and improves
            # accumulation accuracy.
            t = d.reshape(tile_rows // 64, 8, 8, f)
            return t.sum(axis=1).sum(axis=0)
        return d.reshape(tile_rows // 8, 8, f).sum(axis=0)

    if not need_mask:
        o_ref[...] += tile_sum(diff)[None]
    else:
        # Logical (unclamped) first row of this block.  Only partial-tail blocks or
        # clamped duplicate blocks pay for the mask; full blocks take the cheap path.
        row_start = (c * steps + i) * tile_rows
        is_full = row_start + tile_rows <= n_rows

        @pl.when(is_full)
        def _():
            o_ref[...] += tile_sum(diff)[None]

        @pl.when(jnp.logical_not(is_full))
        def _():
            # jnp.where is a lane select, so NaN/-inf from log(garbage) in the masked
            # region does not propagate.  Do not turn this into a multiply-by-mask.
            row_ids = row_start + lax.broadcasted_iota(jnp.int32, (tile_rows, 1), 0)
            masked = jnp.where(row_ids < n_rows, diff, 0.0)
            o_ref[...] += tile_sum(masked)[None]


def log_scale_stft_loss(x_mag, y_mag, *, target_block_bytes=None, num_splits=None):
    """Pallas equivalent of F.l1_loss(log(y_mag), log(x_mag)) (scalar mean).

    Accepts float32 or bfloat16 magnitudes; compute/accumulation is float32.
    """
    assert x_mag.shape == y_mag.shape
    B, T, F = x_mag.shape
    total_elems = B * T * F
    R = B * T

    if target_block_bytes is None:
        target_block_bytes = _default_target_block_bytes()
    if num_splits is None:
        num_splits = _default_num_splits()

    # Free reshape: contiguous, frequency stays the (lane) minor dim.
    x2 = x_mag.reshape(R, F)
    y2 = y_mag.reshape(R, F)

    itemsize = jnp.dtype(x_mag.dtype).itemsize
    bytes_per_row = F * itemsize

    # Row tile: ~target_block_bytes per input block, a multiple of 8 sublanes
    # (preferably 64 for the two-stage reduce), never larger than one split's rows.
    tile_rows = max(8, (target_block_bytes // bytes_per_row) // 8 * 8)
    if tile_rows >= 64:
        tile_rows = (tile_rows // 64) * 64
    tile_rows = min(tile_rows, _round_up(pl.cdiv(R, num_splits), 8))

    n_blocks = pl.cdiv(R, tile_rows)
    splits = min(num_splits, n_blocks)   # 2-way only on multi-TC chips
    steps = pl.cdiv(n_blocks, splits)

    # Best effort: if blocks don't divide evenly across splits, shrink tile_rows so
    # they do — removes the wasted duplicate clamped block (and often the mask).
    if splits > 1 and splits * steps != n_blocks:
        cand = _round_up(pl.cdiv(R, splits * steps), 8)
        if cand >= 8 and (splits * steps - 1) * cand < R:
            tile_rows = cand
            n_blocks = pl.cdiv(R, tile_rows)   # == splits * steps now

    need_clamp = (splits * steps != n_blocks)
    need_mask = (R % tile_rows != 0) or need_clamp

    # Clamp the block index so a DMA never starts fully out of bounds when the block
    # count is still ragged across splits; the kernel masks by the *unclamped* row
    # index so clamped duplicate blocks contribute exactly 0.
    if need_clamp:
        def in_index_map(c, i):
            return (jnp.minimum(c * steps + i, n_blocks - 1), 0)
    else:
        def in_index_map(c, i):
            return (c * steps + i, 0)

    # VMEM budget: 2 inputs x 2 buffers x block + output/headroom, capped so it also
    # fits v7x's 64 MiB per-TC VMEM.  (v5e default scoped limit is only 16 MiB.)
    block_bytes = tile_rows * F * itemsize
    vmem_limit = int(min(56 << 20, max(32 << 20, 4 * block_bytes + (8 << 20))))

    kernel = functools.partial(
        _log_l1_kernel,
        tile_rows=tile_rows,
        steps=steps,
        n_rows=R,
        need_mask=need_mask,
    )

    partials = pl.pallas_call(
        kernel,
        out_shape=jax.ShapeDtypeStruct((splits, 8, F), jnp.float32),
        grid_spec=pltpu.PrefetchScalarGridSpec(
            num_scalar_prefetch=0,
            grid=(splits, steps),
            in_specs=[
                pl.BlockSpec((tile_rows, F), in_index_map),
                pl.BlockSpec((tile_rows, F), in_index_map),
            ],
            out_specs=pl.BlockSpec((1, 8, F), lambda c, i: (c, 0, 0)),
        ),
        compiler_params=pltpu.CompilerParams(
            dimension_semantics=("parallel", "arbitrary"),
            vmem_limit_bytes=vmem_limit,
        ),
    )(x2, y2)

    # Tiny final reduction + mean normalization outside the kernel.
    return jnp.sum(partials) / jnp.float32(total_elems)


if __name__ == "__main__":
    key = jax.random.PRNGKey(0)

    def ref_loss(x, y):
        xf = x.astype(jnp.float32)
        yf = y.astype(jnp.float32)
        return jnp.mean(jnp.abs(jnp.log(yf) - jnp.log(xf)))

    k1, k2, k3, k4, k5, k6 = jax.random.split(key, 6)

    # Test 1: small, realistic STFT bin count (F = 257, not a multiple of 128).
    B, Tn, F = 2, 16, 257
    x_mag = jnp.exp(jax.random.normal(k1, (B, Tn, F), dtype=jnp.float32))
    y_mag = jnp.exp(jax.random.normal(k2, (B, Tn, F), dtype=jnp.float32))
    loss1 = log_scale_stft_loss(x_mag, y_mag)
    jax.block_until_ready(loss1)
    assert jnp.allclose(loss1, ref_loss(x_mag, y_mag), rtol=1e-5, atol=1e-6), loss1

    # Test 2: tiny block target + forced 2-way split to exercise the even-split
    # re-derivation, the ragged-tail masked branch, and the clamped index map.
    B2, T2, F2 = 2, 60, 257
    x2 = jnp.exp(jax.random.normal(k3, (B2, T2, F2), dtype=jnp.float32))
    y2 = jnp.exp(jax.random.normal(k4, (B2, T2, F2), dtype=jnp.float32))
    loss2 = log_scale_stft_loss(x2, y2, target_block_bytes=64 << 10, num_splits=2)
    jax.block_until_ready(loss2)
    assert jnp.allclose(loss2, ref_loss(x2, y2), rtol=1e-5, atol=1e-6), loss2

    # Test 3: bf16 magnitudes (halves HBM bytes; kernel upcasts to f32 internally).
    B3, T3, F3 = 2, 24, 257
    x3 = jnp.exp(jax.random.normal(k5, (B3, T3, F3), dtype=jnp.float32)).astype(jnp.bfloat16)
    y3 = jnp.exp(jax.random.normal(k6, (B3, T3, F3), dtype=jnp.float32)).astype(jnp.bfloat16)
    loss3 = log_scale_stft_loss(x3, y3)
    jax.block_until_ready(loss3)
    assert jnp.allclose(loss3, ref_loss(x3, y3), rtol=1e-4, atol=1e-5), loss3

    print("KERNEL_OK")
</pallas_src>

<mosaic_0001>
module attributes {stable_mosaic.version = 11 : i64} {
  func.func @_log_l1_kernel(%arg0: i32, %arg1: i32, %arg2: memref<32x257xf32, #tpu.memory_space<vmem>>, %arg3: memref<32x257xf32, #tpu.memory_space<vmem>>, %arg4: memref<1x8x257xf32, #tpu.memory_space<vmem>>) attributes {dimension_semantics = [#tpu.dimension_semantics<parallel>, #tpu.dimension_semantics<arbitrary>], iteration_bounds = array<i64: 1, 1>, scalar_prefetch = 0 : i64, scratch_operands = 0 : i64, tpu.core_type = #tpu.core_type<tc>, window_params = [{transform_indices = @transform_0, window_bounds = array<i64: 32, 257>}, {transform_indices = @transform_1, window_bounds = array<i64: 32, 257>}, {transform_indices = @transform_2, window_bounds = array<i64: 1, 8, 257>}]} {
    %c0_i32 = arith.constant 0 : i32
    %0 = arith.cmpi eq, %arg1, %c0_i32 : i32
    %1 = arith.extui %0 : i1 to i32
    %c0_i32_0 = arith.constant 0 : i32
    %2 = arith.cmpi ne, %1, %c0_i32_0 : i32
    scf.if %2 {
      %cst_10 = arith.constant 0.000000e+00 : f32
      %15 = vector.broadcast %cst_10 : f32 to vector<1x8x257xf32>
      %c0_11 = arith.constant 0 : index
      %c0_12 = arith.constant 0 : index
      %c0_13 = arith.constant 0 : index
      %16 = vector.load %arg4[%c0_11, %c0_12, %c0_13] : memref<1x8x257xf32, #tpu.memory_space<vmem>>, vector<1x8x257xf32>
      tpu.vector_store %arg4[%c0_11, %c0_12, %c0_13], %15 {strides = array<i32>} : memref<1x8x257xf32, #tpu.memory_space<vmem>>, vector<1x8x257xf32>,
    } else {
    }
    %c0 = arith.constant 0 : index
    %c0_1 = arith.constant 0 : index
    %3 = vector.load %arg2[%c0, %c0_1] : memref<32x257xf32, #tpu.memory_space<vmem>>, vector<32x257xf32>
    %c0_2 = arith.constant 0 : index
    %c0_3 = arith.constant 0 : index
    %4 = vector.load %arg3[%c0_2, %c0_3] : memref<32x257xf32, #tpu.memory_space<vmem>>, vector<32x257xf32>
    %5 = math.log %4 : vector<32x257xf32>
    %6 = math.log %3 : vector<32x257xf32>
    %7 = arith.subf %5, %6 : vector<32x257xf32>
    %8 = math.absf %7 : vector<32x257xf32>
    %c0_4 = arith.constant 0 : index
    %c0_5 = arith.constant 0 : index
    %c0_6 = arith.constant 0 : index
    %9 = vector.load %arg4[%c0_4, %c0_5, %c0_6] : memref<1x8x257xf32, #tpu.memory_space<vmem>>, vector<1x8x257xf32>
    %10 = vector.shape_cast %8 : vector<32x257xf32> to vector<4x8x257xf32>
    %cst = arith.constant dense<0.000000e+00> : vector<8x257xf32>
    %11 = vector.multi_reduction <add>, %10, %cst [0] : vector<4x8x257xf32> to vector<8x257xf32>
    %12 = vector.shape_cast %11 : vector<8x257xf32> to vector<1x8x257xf32>
    %13 = arith.addf %9, %12 : vector<1x8x257xf32>
    %c0_7 = arith.constant 0 : index
    %c0_8 = arith.constant 0 : index
    %c0_9 = arith.constant 0 : index
    %14 = vector.load %arg4[%c0_7, %c0_8, %c0_9] : memref<1x8x257xf32, #tpu.memory_space<vmem>>, vector<1x8x257xf32>
    tpu.vector_store %arg4[%c0_7, %c0_8, %c0_9], %13 {strides = array<i32>} : memref<1x8x257xf32, #tpu.memory_space<vmem>>, vector<1x8x257xf32>,
    return
  }
  func.func @transform_0(%arg0: i32, %arg1: i32) -> (i32, i32) {
    %c1_i32 = arith.constant 1 : i32
    %0 = arith.muli %arg0, %c1_i32 : i32
    %1 = arith.addi %0, %arg1 : i32
    %c0_i32 = arith.constant 0 : i32
    %c0_i32_0 = arith.constant 0 : i32
    return %1, %c0_i32 : i32, i32
  }
  func.func @transform_1(%arg0: i32, %arg1: i32) -> (i32, i32) {
    %c1_i32 = arith.constant 1 : i32
    %0 = arith.muli %arg0, %c1_i32 : i32
    %1 = arith.addi %0, %arg1 : i32
    %c0_i32 = arith.constant 0 : i32
    %c0_i32_0 = arith.constant 0 : i32
    return %1, %c0_i32 : i32, i32
  }
  func.func @transform_2(%arg0: i32, %arg1: i32) -> (i32, i32, i32) {
    %c0_i32 = arith.constant 0 : i32
    %c0_i32_0 = arith.constant 0 : i32
    %c0_i32_1 = arith.constant 0 : i32
    return %arg0, %c0_i32, %c0_i32_0 : i32, i32, i32
  }
}

</mosaic_0001>

<llo_original>
// kernel: tpu_custom_call.1
$region0: #{tpu_custom_call.1}
  #allocation0 [shape = 'u32[]', space=smem, size = 0x4, offset = 0x4, fixed_abs, tag = 'smem constant byte address 0x4 - core index']
  #allocation1 [shape = 'u32[72,128]{1,0:T(1,128)}', space=vmem, size = 0x9000, scoped, tag = 'internal scratch']
  %s0 = inlined_call_operand.hbm [shape: f32[32,257], index: 0, kind: input, shape index: {}]
  %s1 = inlined_call_operand.hbm [shape: f32[32,257], index: 1, kind: input, shape index: {}]
  %s2 = inlined_call_operand.hbm [shape: f32[1,8,257], index: 2, kind: output, shape index: {}]
  %s3 = sld [smem:[#allocation0]]
  $region30: #{tpu_custom_call.1} parent=0
    _
  %s5 = ssub.s32 1, %s3
  %s6 = scalar_select 0, %s5, %s3
  $region1: #{tpu_custom_call.1} parent=0
    #allocation2 [shape = 'u8[49152]{0}', space=vmem, size = 0xc000, scoped, tag = 'input window, operand 0, single buffered']
    #allocation3 [shape = 's32[1]{0}', space=sflag, size = 0x4, scoped, tag = 'scoped memory for tpu_custom_call.1']
    #allocation4 [shape = 's32[1]{0}', space=sflag, size = 0x4, scoped, tag = 'scoped memory for tpu_custom_call.1']
    #allocation5 [shape = 'u8[49152]{0}', space=vmem, size = 0xc000, scoped, tag = 'input window, operand 1, single buffered']
    #allocation6 [shape = 's32[1]{0}', space=sflag, size = 0x4, scoped, tag = 'scoped memory for tpu_custom_call.1']
    #allocation7 [shape = 'u8[12288]{0}', space=vmem, size = 0x3000, scoped, tag = 'output window, operand 0, single buffered']
    %7 = vsyncpa [#allocation3], 0
    %8 = vsyncpa [#allocation6], 0
    %9 = vsyncpa [#allocation4], 0
    // Predicated region
    $region2: #{tpu_custom_call.1} parent=1 // pred_check
      _
    $region3: #{tpu_custom_call.1} parent=1 // pred_check_branch
      %11 = sbr.rel (0) target = $region5
    $region4: #{tpu_custom_call.1} parent=1 // pred_region
      %s12 = sadd.s32 0, 0
      %s13 = smul.u32 4, %s12
      %15 = vsyncadd [#allocation3], 0
      %s16 = smul.addr %s13, 3
      %s17 = smul.addr %s16, 8
      %s18 = scalar_lea.hbm %s0, %s17
      %s19 = sshll.u32 %s18, 4
      %s20 = int_to_ptr.hbm [resolvable:$true] %s19
      %s21 = sshll.u32 [#allocation2], 4
      %s22 = int_to_ptr.vmem [resolvable:$true] %s21
      %27 = dma.hbm_to_vmem [thread:$0]  %s20, 1536, %s22, [#allocation3], 384, 384, 24
    $region5: #{tpu_custom_call.1} parent=1 // pred_fallthru
      _
    // Predicated region
    $region6: #{tpu_custom_call.1} parent=1 // pred_check
      _
    $region7: #{tpu_custom_call.1} parent=1 // pred_check_branch
      %29 = sbr.rel (0) target = $region9
    $region8: #{tpu_custom_call.1} parent=1 // pred_region
      %s30 = sadd.s32 0, 0
      %s31 = smul.u32 4, %s30
      %33 = vsyncadd [#allocation6], 0
      %s34 = smul.addr %s31, 3
      %s35 = smul.addr %s34, 8
      %s36 = scalar_lea.hbm %s1, %s35
      %s37 = sshll.u32 %s36, 4
      %s38 = int_to_ptr.hbm [resolvable:$true] %s37
      %s39 = sshll.u32 [#allocation5], 4
      %s40 = int_to_ptr.vmem [resolvable:$true] %s39
      %45 = dma.hbm_to_vmem [thread:$0]  %s38, 1536, %s40, [#allocation6], 384, 384, 24
    $region9: #{tpu_custom_call.1} parent=1 // pred_fallthru
      _
    // Predicated region
    $region10: #{tpu_custom_call.1} parent=1 // pred_check
      _
    $region11: #{tpu_custom_call.1} parent=1 // pred_check_branch
      %47 = sbr.rel (0) target = $region13
    $region12: #{tpu_custom_call.1} parent=1 // pred_region
      %49 = dma.done [#allocation3], 1536
    $region13: #{tpu_custom_call.1} parent=1 // pred_fallthru
      _
    // Predicated region
    $region14: #{tpu_custom_call.1} parent=1 // pred_check
      _
    $region15: #{tpu_custom_call.1} parent=1 // pred_check_branch
      %51 = sbr.rel (0) target = $region17
    $region16: #{tpu_custom_call.1} parent=1 // pred_region
      %53 = dma.done [#allocation6], 1536
    $region17: #{tpu_custom_call.1} parent=1 // pred_fallthru
      _
    %s54 = sadd.s32 0, 0
    %s55 = smul.u32 4, %s54
    %s56 = sadd.s32 0, 0
    %s57 = smul.u32 4, %s56
    %p58 = scmp.eq.s32.totalorder 0, 0
    // Predicated region
    $region18: #{tpu_custom_call.1} parent=1 // pred_check
      %p59 = pneg %p58
    $region19: #{tpu_custom_call.1} parent=1 // pred_check_branch
      %61 = sbr.rel (%p59) target = $region21
    $region20: #{tpu_custom_call.1} parent=1 // pred_region
      %62 = vst [vmem:[#allocation7] sm:$0xff] 0.0
      %63 = vst [vmem:[#allocation7 + $0x8] sm:$0xff] 0.0
      %vm64 = vcmask 7168
      %65 = vst.msk [vmem:[#allocation7 + $0x10] sm:$0xff] %vm64, 0.0
    $region21: #{tpu_custom_call.1} parent=1 // pred_fallthru
      _
    %v66 = vld [vmem:[#allocation2] sm:$0xff]
    %v67 = vld [vmem:[#allocation2 + $0x8] sm:$0xff]
    %v68 = vld [vmem:[#allocation2 + $0x10] sm:$0xff]
    %v69 = vld [vmem:[#allocation2 + $0x18] sm:$0xff]
    %v70 = vld [vmem:[#allocation2 + $0x20] sm:$0xff]
    %v71 = vld [vmem:[#allocation2 + $0x28] sm:$0xff]
    %v72 = vld [vmem:[#allocation2 + $0x30] sm:$0xff]
    %v73 = vld [vmem:[#allocation2 + $0x38] sm:$0xff]
    %v74 = vld [vmem:[#allocation2 + $0x40] sm:$0xff]
    %v75 = vld [vmem:[#allocation2 + $0x48] sm:$0xff]
    %v76 = vld [vmem:[#allocation2 + $0x50] sm:$0xff]
    %v77 = vld [vmem:[#allocation2 + $0x58] sm:$0xff]
    %v78 = vld [vmem:[#allocation5] sm:$0xff]
    %v79 = vld [vmem:[#allocation5 + $0x8] sm:$0xff]
    %v80 = vld [vmem:[#allocation5 + $0x10] sm:$0xff]
    %v81 = vld [vmem:[#allocation5 + $0x18] sm:$0xff]
    %v82 = vld [vmem:[#allocation5 + $0x20] sm:$0xff]
    %v83 = vld [vmem:[#allocation5 + $0x28] sm:$0xff]
    %v84 = vld [vmem:[#allocation5 + $0x30] sm:$0xff]
    %v85 = vld [vmem:[#allocation5 + $0x38] sm:$0xff]
    %v86 = vld [vmem:[#allocation5 + $0x40] sm:$0xff]
    %v87 = vld [vmem:[#allocation5 + $0x48] sm:$0xff]
    %v88 = vld [vmem:[#allocation5 + $0x50] sm:$0xff]
    %v89 = vld [vmem:[#allocation5 + $0x58] sm:$0xff]
    %v90 = vlog2.pop %v78
    %v91 = vmul.f32 %v90, 0.6931472
    %v92 = vlog2.pop %v79
    %v93 = vmul.f32 %v92, 0.6931472
    %v94 = vlog2.pop %v80
    %v95 = vmul.f32 %v94, 0.6931472
    %v96 = vlog2.pop %v81
    %v97 = vmul.f32 %v96, 0.6931472
    %v98 = vlog2.pop %v82
    %v99 = vmul.f32 %v98, 0.6931472
    %v100 = vlog2.pop %v83
    %v101 = vmul.f32 %v100, 0.6931472
    %v102 = vlog2.pop %v84
    %v103 = vmul.f32 %v102, 0.6931472
    %v104 = vlog2.pop %v85
    %v105 = vmul.f32 %v104, 0.6931472
    %v106 = vlog2.pop %v86
    %v107 = vmul.f32 %v106, 0.6931472
    %v108 = vlog2.pop %v87
    %v109 = vmul.f32 %v108, 0.6931472
    %v110 = vlog2.pop %v88
    %v111 = vmul.f32 %v110, 0.6931472
    %v112 = vlog2.pop %v89
    %v113 = vmul.f32 %v112, 0.6931472
    %v114 = vlog2.pop %v66
    %v115 = vmul.f32 %v114, 0.6931472
    %v116 = vlog2.pop %v67
    %v117 = vmul.f32 %v116, 0.6931472
    %v118 = vlog2.pop %v68
    %v119 = vmul.f32 %v118, 0.6931472
    %v120 = vlog2.pop %v69
    %v121 = vmul.f32 %v120, 0.6931472
    %v122 = vlog2.pop %v70
    %v123 = vmul.f32 %v122, 0.6931472
    %v124 = vlog2.pop %v71
    %v125 = vmul.f32 %v124, 0.6931472
    %v126 = vlog2.pop %v72
    %v127 = vmul.f32 %v126, 0.6931472
    %v128 = vlog2.pop %v73
    %v129 = vmul.f32 %v128, 0.6931472
    %v130 = vlog2.pop %v74
    %v131 = vmul.f32 %v130, 0.6931472
    %v132 = vlog2.pop %v75
    %v133 = vmul.f32 %v132, 0.6931472
    %v134 = vlog2.pop %v76
    %v135 = vmul.f32 %v134, 0.6931472
    %v136 = vlog2.pop %v77
    %v137 = vmul.f32 %v136, 0.6931472
    %v138 = vsub.f32 %v91, %v115
    %v139 = vsub.f32 %v93, %v117
    %v140 = vsub.f32 %v95, %v119
    %v141 = vsub.f32 %v97, %v121
    %v142 = vsub.f32 %v99, %v123
    %v143 = vsub.f32 %v101, %v125
    %v144 = vsub.f32 %v103, %v127
    %v145 = vsub.f32 %v105, %v129
    %v146 = vsub.f32 %v107, %v131
    %v147 = vsub.f32 %v109, %v133
    %v148 = vsub.f32 %v111, %v135
    %v149 = vsub.f32 %v113, %v137
    %v150 = vand.u32 2147483647, %v138
    %v151 = vand.u32 2147483647, %v139
    %v152 = vand.u32 2147483647, %v140
    %v153 = vand.u32 2147483647, %v141
    %v154 = vand.u32 2147483647, %v142
    %v155 = vand.u32 2147483647, %v143
    %v156 = vand.u32 2147483647, %v144
    %v157 = vand.u32 2147483647, %v145
    %v158 = vand.u32 2147483647, %v146
    %v159 = vand.u32 2147483647, %v147
    %v160 = vand.u32 2147483647, %v148
    %v161 = vand.u32 2147483647, %v149
    %v162 = vld [vmem:[#allocation7] sm:$0xff]
    %v163 = vld [vmem:[#allocation7 + $0x8] sm:$0xff]
    %v164 = vld [vmem:[#allocation7 + $0x10] sm:$0xff]
    %v165 = vadd.f32 %v150, %v153
    %v166 = vadd.f32 %v165, %v156
    %v167 = vadd.f32 %v166, %v159
    %v168 = vadd.f32 %v151, %v154
    %v169 = vadd.f32 %v168, %v157
    %v170 = vadd.f32 %v169, %v160
    %vm171 = vcmask 7168
    %v172 = vsel %vm171, %v152, 0.0
    %v173 = vsel %vm171, %v155, 0.0
    %v174 = vadd.f32 %v172, %v173
    %v175 = vsel %vm171, %v158, 0.0
    %v176 = vadd.f32 %v174, %v175
    %v177 = vsel %vm171, %v161, 0.0
    %v178 = vadd.f32 %v176, %v177
    %v179 = vadd.f32 %v162, %v167
    %v180 = vadd.f32 %v163, %v170
    %v181 = vadd.f32 %v164, %v178
    %182 = vst [vmem:[#allocation7] sm:$0xff] %v179
    %183 = vst [vmem:[#allocation7 + $0x8] sm:$0xff] %v180
    %184 = vst.msk [vmem:[#allocation7 + $0x10] sm:$0xff] %vm171, %v181
    // Predicated region
    $region22: #{tpu_custom_call.1} parent=1 // pred_check
      _
    $region23: #{tpu_custom_call.1} parent=1 // pred_check_branch
      %186 = sbr.rel (0) target = $region25
    $region24: #{tpu_custom_call.1} parent=1 // pred_region
      %188 = vsyncadd [#allocation4], 0
      %s190 = sshll.u32 [#allocation7], 4
      %s191 = int_to_ptr.vmem [resolvable:$true] %s190
      %s192 = sshll.u32 %s2, 4
      %s193 = int_to_ptr.hbm [resolvable:$true] %s192
      %195 = dma.vmem_to_hbm [thread:$0]  %s191, 384, %s193, [#allocation4]
    $region25: #{tpu_custom_call.1} parent=1 // pred_fallthru
      _
    // Predicated region
    $region26: #{tpu_custom_call.1} parent=1 // pred_check
      _
    $region27: #{tpu_custom_call.1} parent=1 // pred_check_branch
      %197 = sbr.rel (0) target = $region29
    $region28: #{tpu_custom_call.1} parent=1 // pred_region
      %199 = dma.done [#allocation4], 384
    $region29: #{tpu_custom_call.1} parent=1 // pred_fallthru
      _
    %200 = vsyncpa [#allocation3], 1
    %201 = vsyncpa [#allocation6], 1
    %202 = vsyncpa [#allocation4], 1

</llo_original>
